<compile_context>
chip_gen: v6e
topology: v6e:2x2x1
jax: 0.10.0
libtpu: 0.0.40
codegen_flags: <defaults>
</compile_context>

<pallas_src>
import functools

import jax
import jax.numpy as jnp
from jax.experimental import pallas as pl
from jax.experimental.pallas import tpu as pltpu

H1, H2 = 400, 300      # logical hidden widths (PyTorch module)
H1P, H2P = 512, 384    # lane-aligned (multiple-of-128) padded widths
AP = 128               # lane-dense padded action width


def _actor_kernel(x_ref, w1_ref, w2_ref, w3_ref, o_ref, *, range_diff: float, offset: float):
    s_dim = w1_ref.shape[0] - 1            # static: logical state width (last row of W1_aug = b1)
    x = x_ref[...].astype(jnp.bfloat16)
    # fc1 + ReLU: bf16 MXU inputs, f32 accumulate; b1 added in f32.
    h1 = jnp.dot(x, w1_ref[:s_dim, :], preferred_element_type=jnp.float32)
    h1 = jnp.maximum(h1 + w1_ref[s_dim:, :].astype(jnp.float32), 0.0)
    # fc2 + ReLU: b2 sits in row H1 of W2_aug and is picked up by the constant-1
    # carry lane (lane 400) of h1, so no separate bias add/DMA.
    h2 = jnp.dot(h1.astype(jnp.bfloat16), w2_ref[...], preferred_element_type=jnp.float32)
    h2 = jnp.maximum(h2, 0.0)
    # fc3: b3 sits in row H2 of W3_aug, picked up by carry lane 300 of h2.
    a = jnp.dot(h2.astype(jnp.bfloat16), w3_ref[...], preferred_element_type=jnp.float32)
    # tanh + action rescale (f32 epilogue, constants baked in).
    o_ref[...] = (jnp.tanh(a) * range_diff + offset).astype(o_ref.dtype)


def _choose_tm(batch):
    """Adaptive batch tile: single tile for B<=1024, else a large divisor tile."""
    if batch <= 1024:
        return batch
    for tm in (512, 1024, 256, 128):
        if batch % tm == 0:
            return tm
    return 512  # rare fallback: non-divisible large batch gets padded


def actor_forward(state, kparams, action_dim, action_bounds, *, tm=None):
    """state: [B, state_dim] f32.  kparams: packed bf16 params from prepare_actor_params."""
    lo, hi = action_bounds
    assert hi > lo
    range_diff = float(hi - lo)
    offset = float((lo + hi) / 2.0)

    B, S = state.shape
    if tm is None:
        tm = _choose_tm(B)
    n_tiles = pl.cdiv(B, tm)
    B_pad = n_tiles * tm
    if B_pad != B:  # only hit for large batches not divisible by any tile choice
        state = jnp.pad(state, ((0, B_pad - B), (0, 0)))

    kernel = functools.partial(_actor_kernel, range_diff=range_diff, offset=offset)

    out_pad = pl.pallas_call(
        kernel,
        out_shape=jax.ShapeDtypeStruct((B_pad, AP), jnp.float32),
        grid_spec=pltpu.PrefetchScalarGridSpec(
            num_scalar_prefetch=0,
            grid=(n_tiles,),
            in_specs=[
                # state tile: pipelined / double-buffered across batch tiles
                pl.BlockSpec((tm, S), lambda i: (i, 0)),
                # weights: whole-array VMEM residency (no double buffering, 1 DMA each)
                pl.BlockSpec(memory_space=pltpu.MemorySpace.VMEM),
                pl.BlockSpec(memory_space=pltpu.MemorySpace.VMEM),
                pl.BlockSpec(memory_space=pltpu.MemorySpace.VMEM),
            ],
            out_specs=pl.BlockSpec((tm, AP), lambda i: (i, 0)),
        ),
        compiler_params=pltpu.CompilerParams(
            dimension_semantics=("parallel",)),
    )(state, kparams["W1"], kparams["W2"], kparams["W3"])

    # strip batch padding and the lane padding of the tiny action dim
    return out_pad[:B, :action_dim]


def init_actor_params(key, state_dim, action_dim, epsilon=0.003):
    """f32 params in [in, out] layout, mirroring the PyTorch module's init."""
    k = jax.random.split(key, 6)
    # fanin_init uses weight.size(0) == out_features in the PyTorch [out, in] layout
    w1_b = 1.0 / (H1 ** 0.5)
    w2_b = 1.0 / (H2 ** 0.5)
    # nn.Linear default bias init: uniform(-1/sqrt(in_features), 1/sqrt(in_features))
    b1_b = 1.0 / (state_dim ** 0.5)
    b2_b = 1.0 / (H1 ** 0.5)
    b3_b = 1.0 / (H2 ** 0.5)
    return {
        "W1": jax.random.uniform(k[0], (state_dim, H1), jnp.float32, -w1_b, w1_b),
        "b1": jax.random.uniform(k[1], (1, H1), jnp.float32, -b1_b, b1_b),
        "W2": jax.random.uniform(k[2], (H1, H2), jnp.float32, -w2_b, w2_b),
        "b2": jax.random.uniform(k[3], (1, H2), jnp.float32, -b2_b, b2_b),
        "W3": jax.random.uniform(k[4], (H2, action_dim), jnp.float32, -epsilon, epsilon),
        "b3": jax.random.uniform(k[5], (1, action_dim), jnp.float32, -b3_b, b3_b),
    }


def prepare_actor_params(params):
    """Pack (W, b) pairs into lane-padded bf16 weight slabs.

    W1_aug[(S+1), 512]: rows 0..S-1 = W1, row S = b1, plus a 1.0 at [S, 400]
    that makes h1's lane 400 a constant 1 after ReLU (the "carry" lane).
    W2_aug[512, 384]:   rows 0..399 = W2, row 400 = b2, plus a 1.0 at [400, 300]
    propagating the constant to h2's lane 300.
    W3_aug[384, 128]:   rows 0..299 = W3, row 300 = b3.
    Zero pads everywhere else make the folds exact up to bf16 storage of the biases.
    """
    S = params["W1"].shape[0]
    A = params["W3"].shape[1]

    w1a = jnp.zeros((S + 1, H1P), jnp.float32)
    w1a = w1a.at[:S, :H1].set(params["W1"])
    w1a = w1a.at[S, :H1].set(params["b1"].reshape(-1))
    w1a = w1a.at[S, H1].set(1.0)            # constant-carry lane (h1 lane 400)

    w2a = jnp.zeros((H1P, H2P), jnp.float32)
    w2a = w2a.at[:H1, :H2].set(params["W2"])
    w2a = w2a.at[H1, :H2].set(params["b2"].reshape(-1))
    w2a = w2a.at[H1, H2].set(1.0)           # constant-carry lane (h2 lane 300)

    w3a = jnp.zeros((H2P, AP), jnp.float32)
    w3a = w3a.at[:H2, :A].set(params["W3"])
    w3a = w3a.at[H2, :A].set(params["b3"].reshape(-1))

    return {
        "W1": w1a.astype(jnp.bfloat16),
        "W2": w2a.astype(jnp.bfloat16),
        "W3": w3a.astype(jnp.bfloat16),
    }


def actor_forward_ref(state, params, action_bounds):
    """Pure-f32 JAX reference mirroring the PyTorch forward."""
    lo, hi = action_bounds
    range_diff = hi - lo
    offset = (lo + hi) / 2.0
    x = jnp.maximum(state @ params["W1"] + params["b1"], 0.0)
    x = jnp.maximum(x @ params["W2"] + params["b2"], 0.0)
    x = jnp.tanh(x @ params["W3"] + params["b3"])
    return x * range_diff + offset


if __name__ == "__main__":
    key = jax.random.PRNGKey(0)
    kp, kx = jax.random.split(key)

    batch = 2
    state_dim = 16
    action_dim = 8
    action_bounds = (-2.0, 2.0)

    params = init_actor_params(kp, state_dim, action_dim)
    kparams = prepare_actor_params(params)
    state = jax.random.normal(kx, (batch, state_dim), jnp.float32)

    out = actor_forward(state, kparams, action_dim, action_bounds)
    out = jax.block_until_ready(out)

    ref = actor_forward_ref(state, params, action_bounds)
    assert out.shape == (batch, action_dim)
    max_err = float(jnp.max(jnp.abs(out - ref)))
    # bf16 weights/biases vs f32 reference: small, bounded numerical delta
    assert max_err < 2e-2, f"mismatch vs f32 reference: max abs err {max_err}"

    print("KERNEL_OK")
</pallas_src>

<mosaic_0001>
module attributes {stable_mosaic.version = 11 : i64} {
  func.func @_actor_kernel(%arg0: i32, %arg1: memref<2x16xf32, #tpu.memory_space<vmem>>, %arg2: memref<17x512xbf16, #tpu.memory_space<vmem>>, %arg3: memref<512x384xbf16, #tpu.memory_space<vmem>>, %arg4: memref<384x128xbf16, #tpu.memory_space<vmem>>, %arg5: memref<2x128xf32, #tpu.memory_space<vmem>>) attributes {dimension_semantics = [#tpu.dimension_semantics<parallel>], iteration_bounds = array<i64: 1>, scalar_prefetch = 0 : i64, scratch_operands = 0 : i64, tpu.core_type = #tpu.core_type<tc>, window_params = [{transform_indices = @transform_0, window_bounds = array<i64: 2, 16>}, {pipeline_mode = #tpu.pipeline_mode<synchronous>, transform_indices = @transform_1, window_bounds = array<i64: 17, 512>}, {pipeline_mode = #tpu.pipeline_mode<synchronous>, transform_indices = @transform_2, window_bounds = array<i64: 512, 384>}, {pipeline_mode = #tpu.pipeline_mode<synchronous>, transform_indices = @transform_3, window_bounds = array<i64: 384, 128>}, {transform_indices = @transform_4, window_bounds = array<i64: 2, 128>}]} {
    %c0 = arith.constant 0 : index
    %c0_0 = arith.constant 0 : index
    %0 = vector.load %arg1[%c0, %c0_0] : memref<2x16xf32, #tpu.memory_space<vmem>>, vector<2x16xf32>
    %1 = arith.truncf %0 : vector<2x16xf32> to vector<2x16xbf16>
    %c0_1 = arith.constant 0 : index
    %c0_2 = arith.constant 0 : index
    %2 = vector.load %arg2[%c0_1, %c0_2] : memref<17x512xbf16, #tpu.memory_space<vmem>>, vector<16x512xbf16>
    %cst = arith.constant dense<0.000000e+00> : vector<2x512xf32>
    %3 = tpu.matmul %1, %2, %cst {dimension_numbers = #tpu.dot_dimension_numbers<[1], [0], [0], [1], [0, 0, 1, 1], [], []>} : vector<2x16xbf16>, vector<16x512xbf16>, vector<2x512xf32> -> vector<2x512xf32>
    %c16 = arith.constant 16 : index
    %c0_3 = arith.constant 0 : index
    %4 = vector.load %arg2[%c16, %c0_3] : memref<17x512xbf16, #tpu.memory_space<vmem>>, vector<1x512xbf16>
    %5 = arith.extf %4 : vector<1x512xbf16> to vector<1x512xf32>
    %6 = vector.broadcast %5 : vector<1x512xf32> to vector<2x512xf32>
    %7 = arith.addf %3, %6 : vector<2x512xf32>
    %cst_4 = arith.constant 0.000000e+00 : f32
    %8 = vector.broadcast %cst_4 : f32 to vector<2x512xf32>
    %9 = arith.maximumf %7, %8 : vector<2x512xf32>
    %10 = arith.truncf %9 : vector<2x512xf32> to vector<2x512xbf16>
    %c0_5 = arith.constant 0 : index
    %c0_6 = arith.constant 0 : index
    %11 = vector.load %arg3[%c0_5, %c0_6] : memref<512x384xbf16, #tpu.memory_space<vmem>>, vector<512x384xbf16>
    %cst_7 = arith.constant dense<0.000000e+00> : vector<2x384xf32>
    %12 = tpu.matmul %10, %11, %cst_7 {dimension_numbers = #tpu.dot_dimension_numbers<[1], [0], [0], [1], [0, 0, 1, 1], [], []>} : vector<2x512xbf16>, vector<512x384xbf16>, vector<2x384xf32> -> vector<2x384xf32>
    %cst_8 = arith.constant 0.000000e+00 : f32
    %13 = vector.broadcast %cst_8 : f32 to vector<2x384xf32>
    %14 = arith.maximumf %12, %13 : vector<2x384xf32>
    %15 = arith.truncf %14 : vector<2x384xf32> to vector<2x384xbf16>
    %c0_9 = arith.constant 0 : index
    %c0_10 = arith.constant 0 : index
    %16 = vector.load %arg4[%c0_9, %c0_10] : memref<384x128xbf16, #tpu.memory_space<vmem>>, vector<384x128xbf16>
    %cst_11 = arith.constant dense<0.000000e+00> : vector<2x128xf32>
    %17 = tpu.matmul %15, %16, %cst_11 {dimension_numbers = #tpu.dot_dimension_numbers<[1], [0], [0], [1], [0, 0, 1, 1], [], []>} : vector<2x384xbf16>, vector<384x128xbf16>, vector<2x128xf32> -> vector<2x128xf32>
    %18 = math.tanh %17 : vector<2x128xf32>
    %cst_12 = arith.constant 4.000000e+00 : f32
    %19 = vector.broadcast %cst_12 : f32 to vector<2x128xf32>
    %20 = arith.mulf %18, %19 : vector<2x128xf32>
    %cst_13 = arith.constant 0.000000e+00 : f32
    %21 = vector.broadcast %cst_13 : f32 to vector<2x128xf32>
    %22 = arith.addf %20, %21 : vector<2x128xf32>
    %c0_14 = arith.constant 0 : index
    %c0_15 = arith.constant 0 : index
    %23 = vector.load %arg5[%c0_14, %c0_15] : memref<2x128xf32, #tpu.memory_space<vmem>>, vector<2x128xf32>
    tpu.vector_store %arg5[%c0_14, %c0_15], %22 {strides = array<i32>} : memref<2x128xf32, #tpu.memory_space<vmem>>, vector<2x128xf32>,
    return
  }
  func.func @transform_0(%arg0: i32) -> (i32, i32) {
    %c0_i32 = arith.constant 0 : i32
    %c0_i32_0 = arith.constant 0 : i32
    return %arg0, %c0_i32 : i32, i32
  }
  func.func @transform_1(%arg0: i32) -> (i32, i32) {
    %c0_i32 = arith.constant 0 : i32
    %c0_i32_0 = arith.constant 0 : i32
    %c0_i32_1 = arith.constant 0 : i32
    return %c0_i32, %c0_i32_0 : i32, i32
  }
  func.func @transform_2(%arg0: i32) -> (i32, i32) {
    %c0_i32 = arith.constant 0 : i32
    %c0_i32_0 = arith.constant 0 : i32
    %c0_i32_1 = arith.constant 0 : i32
    return %c0_i32, %c0_i32_0 : i32, i32
  }
  func.func @transform_3(%arg0: i32) -> (i32, i32) {
    %c0_i32 = arith.constant 0 : i32
    %c0_i32_0 = arith.constant 0 : i32
    %c0_i32_1 = arith.constant 0 : i32
    return %c0_i32, %c0_i32_0 : i32, i32
  }
  func.func @transform_4(%arg0: i32) -> (i32, i32) {
    %c0_i32 = arith.constant 0 : i32
    %c0_i32_0 = arith.constant 0 : i32
    return %arg0, %c0_i32 : i32, i32
  }
}

</mosaic_0001>

<llo_original>
// kernel: tpu_custom_call.1
$region0: #{tpu_custom_call.1}
  #allocation0 [shape = 'u32[]', space=smem, size = 0x4, offset = 0x4, fixed_abs, tag = 'smem constant byte address 0x4 - core index']
  #allocation1 [shape = 'u32[144,128]{1,0:T(1,128)}', space=vmem, size = 0x12000, scoped, tag = 'internal scratch']
  %s0 = inlined_call_operand.hbm [shape: f32[2,16], index: 0, kind: input, shape index: {}]
  %s1 = inlined_call_operand.hbm [shape: bf16[17,512], index: 1, kind: input, shape index: {}]
  %s2 = inlined_call_operand.hbm [shape: bf16[512,384], index: 2, kind: input, shape index: {}]
  %s3 = inlined_call_operand.hbm [shape: bf16[384,128], index: 3, kind: input, shape index: {}]
  %s4 = inlined_call_operand.hbm [shape: f32[2,128], index: 4, kind: output, shape index: {}]
  %s5 = sld [smem:[#allocation0]]
  $region42: #{tpu_custom_call.1} parent=0
    _
  %s7 = ssub.s32 1, %s5
  %s8 = scalar_select 0, %s7, %s5
  $region1: #{tpu_custom_call.1} parent=0
    #allocation2 [shape = 'u8[1024]{0}', space=vmem, size = 0x400, scoped, tag = 'input window, operand 0, single buffered']
    #allocation3 [shape = 's32[1]{0}', space=sflag, size = 0x4, scoped, tag = 'scoped memory for tpu_custom_call.1']
    #allocation4 [shape = 's32[1]{0}', space=sflag, size = 0x4, scoped, tag = 'scoped memory for tpu_custom_call.1']
    #allocation5 [shape = 'u8[24576]{0}', space=vmem, size = 0x6000, scoped, tag = 'input window, operand 1, single buffered']
    #allocation6 [shape = 's32[1]{0}', space=sflag, size = 0x4, scoped, tag = 'scoped memory for tpu_custom_call.1']
    #allocation7 [shape = 'u8[393216]{0}', space=vmem, size = 0x60000, scoped, tag = 'input window, operand 2, single buffered']
    #allocation8 [shape = 'u8[98304]{0}', space=vmem, size = 0x18000, scoped, tag = 'input window, operand 3, single buffered']
    #allocation9 [shape = 's32[1]{0}', space=sflag, size = 0x4, scoped, tag = 'scoped memory for tpu_custom_call.1']
    #allocation10 [shape = 'u8[1024]{0}', space=vmem, size = 0x400, scoped, tag = 'output window, operand 0, single buffered']
    %9 = vsyncpa [#allocation3], 0
    %10 = vsyncpa [#allocation6], 0
    %11 = vsyncpa [#allocation9], 0
    %12 = vsyncpa [#allocation4], 0
    // Predicated region
    $region2: #{tpu_custom_call.1} parent=1 // pred_check
      _
    $region3: #{tpu_custom_call.1} parent=1 // pred_check_branch
      %14 = sbr.rel (0) target = $region5
    $region4: #{tpu_custom_call.1} parent=1 // pred_region
      %s16 = ssub.s32 32, 32
      %17 = vsyncadd [#allocation3], %s16
      %s19 = sshll.u32 [#allocation2], 4
      %s20 = int_to_ptr.vmem [resolvable:$true] %s19
      %22 = dma.hbm_to_vmem [thread:$0]  %s0, 32, %s20, [#allocation3]
    $region5: #{tpu_custom_call.1} parent=1 // pred_fallthru
      _
    // Predicated region
    $region6: #{tpu_custom_call.1} parent=1 // pred_check
      _
    $region7: #{tpu_custom_call.1} parent=1 // pred_check_branch
      %24 = sbr.rel (0) target = $region9
    $region8: #{tpu_custom_call.1} parent=1 // pred_region
      %s26 = ssub.s32 768, 768
      %27 = vsyncadd [#allocation6], %s26
      %s28 = sshll.u32 [#allocation5], 4
      %s29 = int_to_ptr.vmem [resolvable:$true] %s28
      %34 = dma.hbm_to_vmem [thread:$0]  %s1, 768, %s29, [#allocation6], 256, 256, 16
    $region9: #{tpu_custom_call.1} parent=1 // pred_fallthru
      _
    // Predicated region
    $region10: #{tpu_custom_call.1} parent=1 // pred_check
      _
    $region11: #{tpu_custom_call.1} parent=1 // pred_check_branch
      %36 = sbr.rel (0) target = $region13
    $region12: #{tpu_custom_call.1} parent=1 // pred_region
      %s38 = ssub.s32 12288, 12288
      %39 = vsyncadd [#allocation6], %s38
      %s40 = sshll.u32 [#allocation7], 4
      %s41 = int_to_ptr.vmem [resolvable:$true] %s40
      %46 = dma.hbm_to_vmem [thread:$0]  %s2, 12288, %s41, [#allocation6], 192, 192, 12
    $region13: #{tpu_custom_call.1} parent=1 // pred_fallthru
      _
    // Predicated region
    $region14: #{tpu_custom_call.1} parent=1 // pred_check
      _
    $region15: #{tpu_custom_call.1} parent=1 // pred_check_branch
      %48 = sbr.rel (0) target = $region17
    $region16: #{tpu_custom_call.1} parent=1 // pred_region
      %s50 = ssub.s32 3072, 3072
      %51 = vsyncadd [#allocation9], %s50
      %s52 = sshll.u32 [#allocation8], 4
      %s53 = int_to_ptr.vmem [resolvable:$true] %s52
      %58 = dma.hbm_to_vmem [thread:$0]  %s3, 3072, %s53, [#allocation9], 64, 64, 4
    $region17: #{tpu_custom_call.1} parent=1 // pred_fallthru
      _
    // Predicated region
    $region18: #{tpu_custom_call.1} parent=1 // pred_check
      _
    $region19: #{tpu_custom_call.1} parent=1 // pred_check_branch
      %60 = sbr.rel (0) target = $region21
    $region20: #{tpu_custom_call.1} parent=1 // pred_region
      %61 = dma.done [#allocation3], 32
    $region21: #{tpu_custom_call.1} parent=1 // pred_fallthru
      _
    // Predicated region
    $region22: #{tpu_custom_call.1} parent=1 // pred_check
      _
    $region23: #{tpu_custom_call.1} parent=1 // pred_check_branch
      %63 = sbr.rel (0) target = $region25
    $region24: #{tpu_custom_call.1} parent=1 // pred_region
      %64 = dma.done [#allocation6], 768
    $region25: #{tpu_custom_call.1} parent=1 // pred_fallthru
      _
    // Predicated region
    $region26: #{tpu_custom_call.1} parent=1 // pred_check
      _
    $region27: #{tpu_custom_call.1} parent=1 // pred_check_branch
      %66 = sbr.rel (0) target = $region29
    $region28: #{tpu_custom_call.1} parent=1 // pred_region
      %67 = dma.done [#allocation6], 12288
    $region29: #{tpu_custom_call.1} parent=1 // pred_fallthru
      _
    // Predicated region
    $region30: #{tpu_custom_call.1} parent=1 // pred_check
      _
    $region31: #{tpu_custom_call.1} parent=1 // pred_check_branch
      %69 = sbr.rel (0) target = $region33
    $region32: #{tpu_custom_call.1} parent=1 // pred_region
      %70 = dma.done [#allocation9], 3072
    $region33: #{tpu_custom_call.1} parent=1 // pred_fallthru
      _
    %v72 = vld [vmem:[#allocation2] sm:$0x3]
    %v73 = vpack.c.bf16 %v72, %v72
    %v74 = vld [vmem:[#allocation5] sm:$0xff]
    %v75 = vld [vmem:[#allocation5 + $0x8] sm:$0xff]
    %v76 = vld [vmem:[#allocation5 + $0x10] sm:$0xff]
    %v77 = vld [vmem:[#allocation5 + $0x18] sm:$0xff]
    %v78 = vld [vmem:[#allocation5 + $0x20] sm:$0x11]
    %v79 = vld [vmem:[#allocation5 + $0x28] sm:$0x11]
    %v80 = vunpack.c.l.bf16 %v78
    %v81 = vunpack.c.h.bf16 %v78
    %v82 = vunpack.c.l.bf16 %v79
    %v83 = vunpack.c.h.bf16 %v79
    %v84 = vlaneseq
    %v85 = vshrl.u32 %v84, 7
    %v86 = vsub.s32 0, %v85
    %v87 = vrot.slane %v80, %v86
    %v88 = vlaneseq
    %v89 = vshrl.u32 %v88, 7
    %v90 = vsub.s32 0, %v89
    %v91 = vrot.slane %v81, %v90
    %v92 = vlaneseq
    %v93 = vshrl.u32 %v92, 7
    %v94 = vsub.s32 0, %v93
    %v95 = vrot.slane %v82, %v94
    %v96 = vlaneseq
    %v97 = vshrl.u32 %v96, 7
    %v98 = vsub.s32 0, %v97
    %v99 = vrot.slane %v83, %v98
    %v104 = vunpack.c.l.b16 %v74
    %v105 = vunpack.c.h.b16 %v74
    %v106 = vunpack.c.l.b16 %v75
    %v107 = vunpack.c.h.b16 %v75
    %v108 = vunpack.c.l.b16 %v76
    %v109 = vunpack.c.h.b16 %v76
    %v110 = vunpack.c.l.b16 %v77
    %v111 = vunpack.c.h.b16 %v77
    %v112 = vpack.c.b16 %v108, %v104
    %v113 = vpack.c.b16 %v109, %v105
    %v114 = vpack.c.b16 %v110, %v106
    %v115 = vpack.c.b16 %v111, %v107
    %vm120 = vcmask 130048
    %v122 = vsel %vm120, %v73, 0
    %124 = vmatprep.subr.bf16.mxu0 0
    %125 = vmatpush1.bf16.msra.mxu0 0
    %126 = vmatprep.subr.bf16.mxu0 0
    %127 = vmatpush1.bf16.msra.mxu0 0
    %128 = vmatprep.subr.bf16.mxu0 0
    %129 = vmatpush1.bf16.msra.mxu0 0
    %130 = vmatprep.subr.bf16.mxu0 0
    %131 = vmatpush1.bf16.msra.mxu0 0
    %132 = vmatprep.subr.bf16.mxu0 0
    %133 = vmatpush1.bf16.msra.mxu0 0
    %134 = vmatprep.subr.bf16.mxu0 0
    %135 = vmatpush1.bf16.msra.mxu0 0
    %136 = vmatprep.subr.bf16.mxu0 0
    %137 = vmatpush1.bf16.msra.mxu0 0
    %138 = vmatprep.subr.bf16.mxu0 %v113
    %139 = vmatpush1.bf16.msra.mxu0 %v112
    %140 = vmatprep.subr.bf16.mxu0 0
    %141 = vmatpush2.bf16.msra.mxu0 0
    %142 = vmatprep.subr.bf16.mxu0 0
    %143 = vmatpush2.bf16.msra.mxu0 0
    %144 = vmatprep.subr.bf16.mxu0 0
    %145 = vmatpush2.bf16.msra.mxu0 0
    %146 = vmatprep.subr.bf16.mxu0 0
    %147 = vmatpush2.bf16.msra.mxu0 0
    %148 = vmatprep.subr.bf16.mxu0 0
    %149 = vmatpush2.bf16.msra.mxu0 0
    %150 = vmatprep.subr.bf16.mxu0 0
    %151 = vmatpush2.bf16.msra.mxu0 0
    %152 = vmatprep.subr.bf16.mxu0 0
    %153 = vmatpush2.bf16.msra.mxu0 0
    %154 = vmatprep.subr.bf16.mxu0 0
    %155 = vmatpush2.bf16.msra.mxu0 0
    %156 = vmatprep.mubr.bf16.mxu0 0
    %157 = vmatmul.mubr.bf16.gmra.mxu0 %v122
    %v158 = vpop.f32.mrf.mxu0
    %v159 = vadd.f32 %v87, %v158
    %v160 = vpop.f32.mrf.mxu0
    %v161 = vadd.f32 %v91, %v160
    %v162 = vpop.f32.mrf.mxu0
    %v163 = vpop.f32.mrf.mxu0
    %164 = vdwg.mxu0
    %165 = vmatprep.subr.bf16.mxu0 0
    %166 = vmatpush1.bf16.msra.mxu0 0
    %167 = vmatprep.subr.bf16.mxu0 0
    %168 = vmatpush1.bf16.msra.mxu0 0
    %169 = vmatprep.subr.bf16.mxu0 0
    %170 = vmatpush1.bf16.msra.mxu0 0
    %171 = vmatprep.subr.bf16.mxu0 0
    %172 = vmatpush1.bf16.msra.mxu0 0
    %173 = vmatprep.subr.bf16.mxu0 0
    %174 = vmatpush1.bf16.msra.mxu0 0
    %175 = vmatprep.subr.bf16.mxu0 0
    %176 = vmatpush1.bf16.msra.mxu0 0
    %177 = vmatprep.subr.bf16.mxu0 0
    %178 = vmatpush1.bf16.msra.mxu0 0
    %179 = vmatprep.subr.bf16.mxu0 %v115
    %180 = vmatpush1.bf16.msra.mxu0 %v114
    %181 = vmatprep.subr.bf16.mxu0 0
    %182 = vmatpush2.bf16.msra.mxu0 0
    %183 = vmatprep.subr.bf16.mxu0 0
    %184 = vmatpush2.bf16.msra.mxu0 0
    %185 = vmatprep.subr.bf16.mxu0 0
    %186 = vmatpush2.bf16.msra.mxu0 0
    %187 = vmatprep.subr.bf16.mxu0 0
    %188 = vmatpush2.bf16.msra.mxu0 0
    %189 = vmatprep.subr.bf16.mxu0 0
    %190 = vmatpush2.bf16.msra.mxu0 0
    %191 = vmatprep.subr.bf16.mxu0 0
    %192 = vmatpush2.bf16.msra.mxu0 0
    %193 = vmatprep.subr.bf16.mxu0 0
    %194 = vmatpush2.bf16.msra.mxu0 0
    %195 = vmatprep.subr.bf16.mxu0 0
    %196 = vmatpush2.bf16.msra.mxu0 0
    %197 = vmatprep.mubr.bf16.mxu0 0
    %198 = vmatmul.mubr.bf16.gmra.mxu0 %v122
    %v199 = vpop.f32.mrf.mxu0
    %v200 = vadd.f32 %v95, %v199
    %v201 = vpop.f32.mrf.mxu0
    %v202 = vadd.f32 %v99, %v201
    %v203 = vpop.f32.mrf.mxu0
    %v204 = vpop.f32.mrf.mxu0
    %205 = vdwg.mxu0
    %v206 = vmax.f32 %v159, 0.0
    %v207 = vmax.f32 %v161, 0.0
    %v208 = vmax.f32 %v200, 0.0
    %v209 = vmax.f32 %v202, 0.0
    %v210 = vpack.c.bf16 %v206, %v206
    %v211 = vpack.c.bf16 %v207, %v207
    %v212 = vpack.c.bf16 %v208, %v208
    %v213 = vpack.c.bf16 %v209, %v209
    %v214 = vld [vmem:[#allocation7] sm:$0xff]
    %v215 = vld [vmem:[#allocation7 + $0x8] sm:$0xf]
    %v216 = vld [vmem:[#allocation7 + $0xc] sm:$0xff]
    %v217 = vld [vmem:[#allocation7 + $0x14] sm:$0xf]
    %v218 = vld [vmem:[#allocation7 + $0x18] sm:$0xff]
    %v219 = vld [vmem:[#allocation7 + $0x20] sm:$0xf]
    %v220 = vld [vmem:[#allocation7 + $0x24] sm:$0xff]
    %v221 = vld [vmem:[#allocation7 + $0x2c] sm:$0xf]
    %v222 = vld [vmem:[#allocation7 + $0x30] sm:$0xff]
    %v223 = vld [vmem:[#allocation7 + $0x38] sm:$0xf]
    %v224 = vld [vmem:[#allocation7 + $0x3c] sm:$0xff]
    %v225 = vld [vmem:[#allocation7 + $0x44] sm:$0xf]
    %v226 = vld [vmem:[#allocation7 + $0x48] sm:$0xff]
    %v227 = vld [vmem:[#allocation7 + $0x50] sm:$0xf]
    %v228 = vld [vmem:[#allocation7 + $0x54] sm:$0xff]
    %v229 = vld [vmem:[#allocation7 + $0x5c] sm:$0xf]
    %v230 = vld [vmem:[#allocation7 + $0x60] sm:$0xff]
    %v231 = vld [vmem:[#allocation7 + $0x68] sm:$0xf]
    %v232 = vld [vmem:[#allocation7 + $0x6c] sm:$0xff]
    %v233 = vld [vmem:[#allocation7 + $0x74] sm:$0xf]
    %v234 = vld [vmem:[#allocation7 + $0x78] sm:$0xff]
    %v235 = vld [vmem:[#allocation7 + $0x80] sm:$0xf]
    %v236 = vld [vmem:[#allocation7 + $0x84] sm:$0xff]
    %v237 = vld [vmem:[#allocation7 + $0x8c] sm:$0xf]
    %v238 = vld [vmem:[#allocation7 + $0x90] sm:$0xff]
    %v239 = vld [vmem:[#allocation7 + $0x98] sm:$0xf]
    %v240 = vld [vmem:[#allocation7 + $0x9c] sm:$0xff]
    %v241 = vld [vmem:[#allocation7 + $0xa4] sm:$0xf]
    %v242 = vld [vmem:[#allocation7 + $0xa8] sm:$0xff]
    %v243 = vld [vmem:[#allocation7 + $0xb0] sm:$0xf]
    %v244 = vld [vmem:[#allocation7 + $0xb4] sm:$0xff]
    %v245 = vld [vmem:[#allocation7 + $0xbc] sm:$0xf]
    %v246 = vld [vmem:[#allocation7 + $0xc0] sm:$0xff]
    %v247 = vld [vmem:[#allocation7 + $0xc8] sm:$0xf]
    %v248 = vld [vmem:[#allocation7 + $0xcc] sm:$0xff]
    %v249 = vld [vmem:[#allocation7 + $0xd4] sm:$0xf]
    %v250 = vld [vmem:[#allocation7 + $0xd8] sm:$0xff]
    %v251 = vld [vmem:[#allocation7 + $0xe0] sm:$0xf]
    %v252 = vld [vmem:[#allocation7 + $0xe4] sm:$0xff]
    %v253 = vld [vmem:[#allocation7 + $0xec] sm:$0xf]
    %v254 = vld [vmem:[#allocation7 + $0xf0] sm:$0xff]
    %v255 = vld [vmem:[#allocation7 + $0xf8] sm:$0xf]
    %v256 = vld [vmem:[#allocation7 + $0xfc] sm:$0xff]
    %v257 = vld [vmem:[#allocation7 + $0x104] sm:$0xf]
    %v258 = vld [vmem:[#allocation7 + $0x108] sm:$0xff]
    %v259 = vld [vmem:[#allocation7 + $0x110] sm:$0xf]
    %v260 = vld [vmem:[#allocation7 + $0x114] sm:$0xff]
    %v261 = vld [vmem:[#allocation7 + $0x11c] sm:$0xf]
    %v262 = vld [vmem:[#allocation7 + $0x120] sm:$0xff]
    %v263 = vld [vmem:[#allocation7 + $0x128] sm:$0xf]
    %v264 = vld [vmem:[#allocation7 + $0x12c] sm:$0xff]
    %v265 = vld [vmem:[#allocation7 + $0x134] sm:$0xf]
    %v266 = vld [vmem:[#allocation7 + $0x138] sm:$0xff]
    %v267 = vld [vmem:[#allocation7 + $0x140] sm:$0xf]
    %v268 = vld [vmem:[#allocation7 + $0x144] sm:$0xff]
    %v269 = vld [vmem:[#allocation7 + $0x14c] sm:$0xf]
    %v270 = vld [vmem:[#allocation7 + $0x150] sm:$0xff]
    %v271 = vld [vmem:[#allocation7 + $0x158] sm:$0xf]
    %v272 = vld [vmem:[#allocation7 + $0x15c] sm:$0xff]
    %v273 = vld [vmem:[#allocation7 + $0x164] sm:$0xf]
    %v274 = vld [vmem:[#allocation7 + $0x168] sm:$0xff]
    %v275 = vld [vmem:[#allocation7 + $0x170] sm:$0xf]
    %v276 = vld [vmem:[#allocation7 + $0x174] sm:$0xff]
    %v277 = vld [vmem:[#allocation7 + $0x17c] sm:$0xf]
    %v278 = vld [vmem:[#allocation7 + $0x180] sm:$0xff]
    %v279 = vld [vmem:[#allocation7 + $0x188] sm:$0xf]
    %v280 = vld [vmem:[#allocation7 + $0x18c] sm:$0xff]
    %v281 = vld [vmem:[#allocation7 + $0x194] sm:$0xf]
    %v282 = vld [vmem:[#allocation7 + $0x198] sm:$0xff]
    %v283 = vld [vmem:[#allocation7 + $0x1a0] sm:$0xf]
    %v284 = vld [vmem:[#allocation7 + $0x1a4] sm:$0xff]
    %v285 = vld [vmem:[#allocation7 + $0x1ac] sm:$0xf]
    %v286 = vld [vmem:[#allocation7 + $0x1b0] sm:$0xff]
    %v287 = vld [vmem:[#allocation7 + $0x1b8] sm:$0xf]
    %v288 = vld [vmem:[#allocation7 + $0x1bc] sm:$0xff]
    %v289 = vld [vmem:[#allocation7 + $0x1c4] sm:$0xf]
    %v290 = vld [vmem:[#allocation7 + $0x1c8] sm:$0xff]
    %v291 = vld [vmem:[#allocation7 + $0x1d0] sm:$0xf]
    %v292 = vld [vmem:[#allocation7 + $0x1d4] sm:$0xff]
    %v293 = vld [vmem:[#allocation7 + $0x1dc] sm:$0xf]
    %v294 = vld [vmem:[#allocation7 + $0x1e0] sm:$0xff]
    %v295 = vld [vmem:[#allocation7 + $0x1e8] sm:$0xf]
    %v296 = vld [vmem:[#allocation7 + $0x1ec] sm:$0xff]
    %v297 = vld [vmem:[#allocation7 + $0x1f4] sm:$0xf]
    %v298 = vld [vmem:[#allocation7 + $0x1f8] sm:$0xff]
    %v299 = vld [vmem:[#allocation7 + $0x200] sm:$0xf]
    %v300 = vld [vmem:[#allocation7 + $0x204] sm:$0xff]
    %v301 = vld [vmem:[#allocation7 + $0x20c] sm:$0xf]
    %v302 = vld [vmem:[#allocation7 + $0x210] sm:$0xff]
    %v303 = vld [vmem:[#allocation7 + $0x218] sm:$0xf]
    %v304 = vld [vmem:[#allocation7 + $0x21c] sm:$0xff]
    %v305 = vld [vmem:[#allocation7 + $0x224] sm:$0xf]
    %v306 = vld [vmem:[#allocation7 + $0x228] sm:$0xff]
    %v307 = vld [vmem:[#allocation7 + $0x230] sm:$0xf]
    %v308 = vld [vmem:[#allocation7 + $0x234] sm:$0xff]
    %v309 = vld [vmem:[#allocation7 + $0x23c] sm:$0xf]
    %v310 = vld [vmem:[#allocation7 + $0x240] sm:$0xff]
    %v311 = vld [vmem:[#allocation7 + $0x248] sm:$0xf]
    %v312 = vld [vmem:[#allocation7 + $0x24c] sm:$0xff]
    %v313 = vld [vmem:[#allocation7 + $0x254] sm:$0xf]
    %v314 = vld [vmem:[#allocation7 + $0x258] sm:$0xff]
    %v315 = vld [vmem:[#allocation7 + $0x260] sm:$0xf]
    %v316 = vld [vmem:[#allocation7 + $0x264] sm:$0xff]
    %v317 = vld [vmem:[#allocation7 + $0x26c] sm:$0xf]
    %v318 = vld [vmem:[#allocation7 + $0x270] sm:$0xff]
    %v319 = vld [vmem:[#allocation7 + $0x278] sm:$0xf]
    %v320 = vld [vmem:[#allocation7 + $0x27c] sm:$0xff]
    %v321 = vld [vmem:[#allocation7 + $0x284] sm:$0xf]
    %v322 = vld [vmem:[#allocation7 + $0x288] sm:$0xff]
    %v323 = vld [vmem:[#allocation7 + $0x290] sm:$0xf]
    %v324 = vld [vmem:[#allocation7 + $0x294] sm:$0xff]
    %v325 = vld [vmem:[#allocation7 + $0x29c] sm:$0xf]
    %v326 = vld [vmem:[#allocation7 + $0x2a0] sm:$0xff]
    %v327 = vld [vmem:[#allocation7 + $0x2a8] sm:$0xf]
    %v328 = vld [vmem:[#allocation7 + $0x2ac] sm:$0xff]
    %v329 = vld [vmem:[#allocation7 + $0x2b4] sm:$0xf]
    %v330 = vld [vmem:[#allocation7 + $0x2b8] sm:$0xff]
    %v331 = vld [vmem:[#allocation7 + $0x2c0] sm:$0xf]
    %v332 = vld [vmem:[#allocation7 + $0x2c4] sm:$0xff]
    %v333 = vld [vmem:[#allocation7 + $0x2cc] sm:$0xf]
    %v334 = vld [vmem:[#allocation7 + $0x2d0] sm:$0xff]
    %v335 = vld [vmem:[#allocation7 + $0x2d8] sm:$0xf]
    %v336 = vld [vmem:[#allocation7 + $0x2dc] sm:$0xff]
    %v337 = vld [vmem:[#allocation7 + $0x2e4] sm:$0xf]
    %v338 = vld [vmem:[#allocation7 + $0x2e8] sm:$0xff]
    %v339 = vld [vmem:[#allocation7 + $0x2f0] sm:$0xf]
    %v340 = vld [vmem:[#allocation7 + $0x2f4] sm:$0xff]
    %v341 = vld [vmem:[#allocation7 + $0x2fc] sm:$0xf]
    %v470 = vunpack.c.l.b16 %v214
    %v471 = vunpack.c.h.b16 %v214
    %v472 = vunpack.c.l.b16 %v215
    %v473 = vunpack.c.l.b16 %v216
    %v474 = vunpack.c.h.b16 %v216
    %v475 = vunpack.c.l.b16 %v217
    %v476 = vunpack.c.l.b16 %v218
    %v477 = vunpack.c.h.b16 %v218
    %v478 = vunpack.c.l.b16 %v219
    %v479 = vunpack.c.l.b16 %v220
    %v480 = vunpack.c.h.b16 %v220
    %v481 = vunpack.c.l.b16 %v221
    %v482 = vunpack.c.l.b16 %v222
    %v483 = vunpack.c.h.b16 %v222
    %v484 = vunpack.c.l.b16 %v223
    %v485 = vunpack.c.l.b16 %v224
    %v486 = vunpack.c.h.b16 %v224
    %v487 = vunpack.c.l.b16 %v225
    %v488 = vunpack.c.l.b16 %v226
    %v489 = vunpack.c.h.b16 %v226
    %v490 = vunpack.c.l.b16 %v227
    %v491 = vunpack.c.l.b16 %v228
    %v492 = vunpack.c.h.b16 %v228
    %v493 = vunpack.c.l.b16 %v229
    %v494 = vunpack.c.l.b16 %v230
    %v495 = vunpack.c.h.b16 %v230
    %v496 = vunpack.c.l.b16 %v231
    %v497 = vunpack.c.l.b16 %v232
    %v498 = vunpack.c.h.b16 %v232
    %v499 = vunpack.c.l.b16 %v233
    %v500 = vunpack.c.l.b16 %v234
    %v501 = vunpack.c.h.b16 %v234
    %v502 = vunpack.c.l.b16 %v235
    %v503 = vunpack.c.l.b16 %v236
    %v504 = vunpack.c.h.b16 %v236
    %v505 = vunpack.c.l.b16 %v237
    %v506 = vunpack.c.l.b16 %v238
    %v507 = vunpack.c.h.b16 %v238
    %v508 = vunpack.c.l.b16 %v239
    %v509 = vunpack.c.l.b16 %v240
    %v510 = vunpack.c.h.b16 %v240
    %v511 = vunpack.c.l.b16 %v241
    %v512 = vunpack.c.l.b16 %v242
    %v513 = vunpack.c.h.b16 %v242
    %v514 = vunpack.c.l.b16 %v243
    %v515 = vunpack.c.l.b16 %v244
    %v516 = vunpack.c.h.b16 %v244
    %v517 = vunpack.c.l.b16 %v245
    %v518 = vunpack.c.l.b16 %v246
    %v519 = vunpack.c.h.b16 %v246
    %v520 = vunpack.c.l.b16 %v247
    %v521 = vunpack.c.l.b16 %v248
    %v522 = vunpack.c.h.b16 %v248
    %v523 = vunpack.c.l.b16 %v249
    %v524 = vunpack.c.l.b16 %v250
    %v525 = vunpack.c.h.b16 %v250
    %v526 = vunpack.c.l.b16 %v251
    %v527 = vunpack.c.l.b16 %v252
    %v528 = vunpack.c.h.b16 %v252
    %v529 = vunpack.c.l.b16 %v253
    %v530 = vunpack.c.l.b16 %v254
    %v531 = vunpack.c.h.b16 %v254
    %v532 = vunpack.c.l.b16 %v255
    %v533 = vunpack.c.l.b16 %v256
    %v534 = vunpack.c.h.b16 %v256
    %v535 = vunpack.c.l.b16 %v257
    %v536 = vunpack.c.l.b16 %v258
    %v537 = vunpack.c.h.b16 %v258
    %v538 = vunpack.c.l.b16 %v259
    %v539 = vunpack.c.l.b16 %v260
    %v540 = vunpack.c.h.b16 %v260
    %v541 = vunpack.c.l.b16 %v261
    %v542 = vunpack.c.l.b16 %v262
    %v543 = vunpack.c.h.b16 %v262
    %v544 = vunpack.c.l.b16 %v263
    %v545 = vunpack.c.l.b16 %v264
    %v546 = vunpack.c.h.b16 %v264
    %v547 = vunpack.c.l.b16 %v265
    %v548 = vunpack.c.l.b16 %v266
    %v549 = vunpack.c.h.b16 %v266
    %v550 = vunpack.c.l.b16 %v267
    %v551 = vunpack.c.l.b16 %v268
    %v552 = vunpack.c.h.b16 %v268
    %v553 = vunpack.c.l.b16 %v269
    %v554 = vunpack.c.l.b16 %v270
    %v555 = vunpack.c.h.b16 %v270
    %v556 = vunpack.c.l.b16 %v271
    %v557 = vunpack.c.l.b16 %v272
    %v558 = vunpack.c.h.b16 %v272
    %v559 = vunpack.c.l.b16 %v273
    %v560 = vunpack.c.l.b16 %v274
    %v561 = vunpack.c.h.b16 %v274
    %v562 = vunpack.c.l.b16 %v275
    %v563 = vunpack.c.l.b16 %v276
    %v564 = vunpack.c.h.b16 %v276
    %v565 = vunpack.c.l.b16 %v277
    %v566 = vunpack.c.l.b16 %v278
    %v567 = vunpack.c.h.b16 %v278
    %v568 = vunpack.c.l.b16 %v279
    %v569 = vunpack.c.l.b16 %v280
    %v570 = vunpack.c.h.b16 %v280
    %v571 = vunpack.c.l.b16 %v281
    %v572 = vunpack.c.l.b16 %v282
    %v573 = vunpack.c.h.b16 %v282
    %v574 = vunpack.c.l.b16 %v283
    %v575 = vunpack.c.l.b16 %v284
    %v576 = vunpack.c.h.b16 %v284
    %v577 = vunpack.c.l.b16 %v285
    %v578 = vunpack.c.l.b16 %v286
    %v579 = vunpack.c.h.b16 %v286
    %v580 = vunpack.c.l.b16 %v287
    %v581 = vunpack.c.l.b16 %v288
    %v582 = vunpack.c.h.b16 %v288
    %v583 = vunpack.c.l.b16 %v289
    %v584 = vunpack.c.l.b16 %v290
    %v585 = vunpack.c.h.b16 %v290
    %v586 = vunpack.c.l.b16 %v291
    %v587 = vunpack.c.l.b16 %v292
    %v588 = vunpack.c.h.b16 %v292
    %v589 = vunpack.c.l.b16 %v293
    %v590 = vunpack.c.l.b16 %v294
    %v591 = vunpack.c.h.b16 %v294
    %v592 = vunpack.c.l.b16 %v295
    %v593 = vunpack.c.l.b16 %v296
    %v594 = vunpack.c.h.b16 %v296
    %v595 = vunpack.c.l.b16 %v297
    %v596 = vunpack.c.l.b16 %v298
    %v597 = vunpack.c.h.b16 %v298
    %v598 = vunpack.c.l.b16 %v299
    %v599 = vunpack.c.l.b16 %v300
    %v600 = vunpack.c.h.b16 %v300
    %v601 = vunpack.c.l.b16 %v301
    %v602 = vunpack.c.l.b16 %v302
    %v603 = vunpack.c.h.b16 %v302
    %v604 = vunpack.c.l.b16 %v303
    %v605 = vunpack.c.l.b16 %v304
    %v606 = vunpack.c.h.b16 %v304
    %v607 = vunpack.c.l.b16 %v305
    %v608 = vunpack.c.l.b16 %v306
    %v609 = vunpack.c.h.b16 %v306
    %v610 = vunpack.c.l.b16 %v307
    %v611 = vunpack.c.l.b16 %v308
    %v612 = vunpack.c.h.b16 %v308
    %v613 = vunpack.c.l.b16 %v309
    %v614 = vunpack.c.l.b16 %v310
    %v615 = vunpack.c.h.b16 %v310
    %v616 = vunpack.c.l.b16 %v311
    %v617 = vunpack.c.l.b16 %v312
    %v618 = vunpack.c.h.b16 %v312
    %v619 = vunpack.c.l.b16 %v313
    %v620 = vunpack.c.l.b16 %v314
    %v621 = vunpack.c.h.b16 %v314
    %v622 = vunpack.c.l.b16 %v315
    %v623 = vunpack.c.l.b16 %v316
    %v624 = vunpack.c.h.b16 %v316
    %v625 = vunpack.c.l.b16 %v317
    %v626 = vunpack.c.l.b16 %v318
    %v627 = vunpack.c.h.b16 %v318
    %v628 = vunpack.c.l.b16 %v319
    %v629 = vunpack.c.l.b16 %v320
    %v630 = vunpack.c.h.b16 %v320
    %v631 = vunpack.c.l.b16 %v321
    %v632 = vunpack.c.l.b16 %v322
    %v633 = vunpack.c.h.b16 %v322
    %v634 = vunpack.c.l.b16 %v323
    %v635 = vunpack.c.l.b16 %v324
    %v636 = vunpack.c.h.b16 %v324
    %v637 = vunpack.c.l.b16 %v325
    %v638 = vunpack.c.l.b16 %v326
    %v639 = vunpack.c.h.b16 %v326
    %v640 = vunpack.c.l.b16 %v327
    %v641 = vunpack.c.l.b16 %v328
    %v642 = vunpack.c.h.b16 %v328
    %v643 = vunpack.c.l.b16 %v329
    %v644 = vunpack.c.l.b16 %v330
    %v645 = vunpack.c.h.b16 %v330
    %v646 = vunpack.c.l.b16 %v331
    %v647 = vunpack.c.l.b16 %v332
    %v648 = vunpack.c.h.b16 %v332
    %v649 = vunpack.c.l.b16 %v333
    %v650 = vunpack.c.l.b16 %v334
    %v651 = vunpack.c.h.b16 %v334
    %v652 = vunpack.c.l.b16 %v335
    %v653 = vunpack.c.l.b16 %v336
    %v654 = vunpack.c.h.b16 %v336
    %v655 = vunpack.c.l.b16 %v337
    %v656 = vunpack.c.l.b16 %v338
    %v657 = vunpack.c.h.b16 %v338
    %v658 = vunpack.c.l.b16 %v339
    %v659 = vunpack.c.l.b16 %v340
    %v660 = vunpack.c.h.b16 %v340
    %v661 = vunpack.c.l.b16 %v341
    %v662 = vpack.c.b16 %v473, %v470
    %v663 = vpack.c.b16 %v474, %v471
    %v664 = vpack.c.b16 %v475, %v472
    %v665 = vpack.c.b16 %v479, %v476
    %v666 = vpack.c.b16 %v480, %v477
    %v667 = vpack.c.b16 %v481, %v478
    %v668 = vpack.c.b16 %v485, %v482
    %v669 = vpack.c.b16 %v486, %v483
    %v670 = vpack.c.b16 %v487, %v484
    %v671 = vpack.c.b16 %v491, %v488
    %v672 = vpack.c.b16 %v492, %v489
    %v673 = vpack.c.b16 %v493, %v490
    %v674 = vpack.c.b16 %v497, %v494
    %v675 = vpack.c.b16 %v498, %v495
    %v676 = vpack.c.b16 %v499, %v496
    %v677 = vpack.c.b16 %v503, %v500
    %v678 = vpack.c.b16 %v504, %v501
    %v679 = vpack.c.b16 %v505, %v502
    %v680 = vpack.c.b16 %v509, %v506
    %v681 = vpack.c.b16 %v510, %v507
    %v682 = vpack.c.b16 %v511, %v508
    %v683 = vpack.c.b16 %v515, %v512
    %v684 = vpack.c.b16 %v516, %v513
    %v685 = vpack.c.b16 %v517, %v514
    %v686 = vpack.c.b16 %v521, %v518
    %v687 = vpack.c.b16 %v522, %v519
    %v688 = vpack.c.b16 %v523, %v520
    %v689 = vpack.c.b16 %v527, %v524
    %v690 = vpack.c.b16 %v528, %v525
    %v691 = vpack.c.b16 %v529, %v526
    %v692 = vpack.c.b16 %v533, %v530
    %v693 = vpack.c.b16 %v534, %v531
    %v694 = vpack.c.b16 %v535, %v532
    %v695 = vpack.c.b16 %v539, %v536
    %v696 = vpack.c.b16 %v540, %v537
    %v697 = vpack.c.b16 %v541, %v538
    %v698 = vpack.c.b16 %v545, %v542
    %v699 = vpack.c.b16 %v546, %v543
    %v700 = vpack.c.b16 %v547, %v544
    %v701 = vpack.c.b16 %v551, %v548
    %v702 = vpack.c.b16 %v552, %v549
    %v703 = vpack.c.b16 %v553, %v550
    %v704 = vpack.c.b16 %v557, %v554
    %v705 = vpack.c.b16 %v558, %v555
    %v706 = vpack.c.b16 %v559, %v556
    %v707 = vpack.c.b16 %v563, %v560
    %v708 = vpack.c.b16 %v564, %v561
    %v709 = vpack.c.b16 %v565, %v562
    %v710 = vpack.c.b16 %v569, %v566
    %v711 = vpack.c.b16 %v570, %v567
    %v712 = vpack.c.b16 %v571, %v568
    %v713 = vpack.c.b16 %v575, %v572
    %v714 = vpack.c.b16 %v576, %v573
    %v715 = vpack.c.b16 %v577, %v574
    %v716 = vpack.c.b16 %v581, %v578
    %v717 = vpack.c.b16 %v582, %v579
    %v718 = vpack.c.b16 %v583, %v580
    %v719 = vpack.c.b16 %v587, %v584
    %v720 = vpack.c.b16 %v588, %v585
    %v721 = vpack.c.b16 %v589, %v586
    %v722 = vpack.c.b16 %v593, %v590
    %v723 = vpack.c.b16 %v594, %v591
    %v724 = vpack.c.b16 %v595, %v592
    %v725 = vpack.c.b16 %v599, %v596
    %v726 = vpack.c.b16 %v600, %v597
    %v727 = vpack.c.b16 %v601, %v598
    %v728 = vpack.c.b16 %v605, %v602
    %v729 = vpack.c.b16 %v606, %v603
    %v730 = vpack.c.b16 %v607, %v604
    %v731 = vpack.c.b16 %v611, %v608
    %v732 = vpack.c.b16 %v612, %v609
    %v733 = vpack.c.b16 %v613, %v610
    %v734 = vpack.c.b16 %v617, %v614
    %v735 = vpack.c.b16 %v618, %v615
    %v736 = vpack.c.b16 %v619, %v616
    %v737 = vpack.c.b16 %v623, %v620
    %v738 = vpack.c.b16 %v624, %v621
    %v739 = vpack.c.b16 %v625, %v622
    %v740 = vpack.c.b16 %v629, %v626
    %v741 = vpack.c.b16 %v630, %v627
    %v742 = vpack.c.b16 %v631, %v628
    %v743 = vpack.c.b16 %v635, %v632
    %v744 = vpack.c.b16 %v636, %v633
    %v745 = vpack.c.b16 %v637, %v634
    %v746 = vpack.c.b16 %v641, %v638
    %v747 = vpack.c.b16 %v642, %v639
    %v748 = vpack.c.b16 %v643, %v640
    %v749 = vpack.c.b16 %v647, %v644
    %v750 = vpack.c.b16 %v648, %v645
    %v751 = vpack.c.b16 %v649, %v646
    %v752 = vpack.c.b16 %v653, %v650
    %v753 = vpack.c.b16 %v654, %v651
    %v754 = vpack.c.b16 %v655, %v652
    %v755 = vpack.c.b16 %v659, %v656
    %v756 = vpack.c.b16 %v660, %v657
    %v757 = vpack.c.b16 %v661, %v658
    %854 = vmatprep.subr.bf16.mxu0 %v684
    %855 = vmatpush1.bf16.msra.mxu0 %v683
    %856 = vmatprep.subr.bf16.mxu0 %v681
    %857 = vmatpush1.bf16.msra.mxu0 %v680
    %858 = vmatprep.subr.bf16.mxu0 %v678
    %859 = vmatpush1.bf16.msra.mxu0 %v677
    %860 = vmatprep.subr.bf16.mxu0 %v675
    %861 = vmatpush1.bf16.msra.mxu0 %v674
    %862 = vmatprep.subr.bf16.mxu0 %v672
    %863 = vmatpush1.bf16.msra.mxu0 %v671
    %864 = vmatprep.subr.bf16.mxu0 %v669
    %865 = vmatpush1.bf16.msra.mxu0 %v668
    %866 = vmatprep.subr.bf16.mxu0 %v666
    %867 = vmatpush1.bf16.msra.mxu0 %v665
    %868 = vmatprep.subr.bf16.mxu0 %v663
    %869 = vmatpush1.bf16.msra.mxu0 %v662
    %870 = vmatprep.subr.bf16.mxu0 %v708
    %871 = vmatpush2.bf16.msra.mxu0 %v707
    %872 = vmatprep.subr.bf16.mxu0 %v705
    %873 = vmatpush2.bf16.msra.mxu0 %v704
    %874 = vmatprep.subr.bf16.mxu0 %v702
    %875 = vmatpush2.bf16.msra.mxu0 %v701
    %876 = vmatprep.subr.bf16.mxu0 %v699
    %877 = vmatpush2.bf16.msra.mxu0 %v698
    %878 = vmatprep.subr.bf16.mxu0 %v696
    %879 = vmatpush2.bf16.msra.mxu0 %v695
    %880 = vmatprep.subr.bf16.mxu0 %v693
    %881 = vmatpush2.bf16.msra.mxu0 %v692
    %882 = vmatprep.subr.bf16.mxu0 %v690
    %883 = vmatpush2.bf16.msra.mxu0 %v689
    %884 = vmatprep.subr.bf16.mxu0 %v687
    %885 = vmatpush2.bf16.msra.mxu0 %v686
    %886 = vmatprep.mubr.bf16.mxu0 %v211
    %887 = vmatmul.mubr.bf16.gmra.mxu0 %v210
    %v888 = vpop.f32.mrf.mxu0
    %v889 = vadd.f32 0.0, %v888
    %v890 = vpop.f32.mrf.mxu0
    %v891 = vadd.f32 0.0, %v890
    %v892 = vpop.f32.mrf.mxu0
    %v893 = vpop.f32.mrf.mxu0
    %894 = vdwg.mxu0
    %895 = vmatprep.subr.bf16.mxu0 %v732
    %896 = vmatpush1.bf16.msra.mxu0 %v731
    %897 = vmatprep.subr.bf16.mxu0 %v729
    %898 = vmatpush1.bf16.msra.mxu0 %v728
    %899 = vmatprep.subr.bf16.mxu0 %v726
    %900 = vmatpush1.bf16.msra.mxu0 %v725
    %901 = vmatprep.subr.bf16.mxu0 %v723
    %902 = vmatpush1.bf16.msra.mxu0 %v722
    %903 = vmatprep.subr.bf16.mxu0 %v720
    %904 = vmatpush1.bf16.msra.mxu0 %v719
    %905 = vmatprep.subr.bf16.mxu0 %v717
    %906 = vmatpush1.bf16.msra.mxu0 %v716
    %907 = vmatprep.subr.bf16.mxu0 %v714
    %908 = vmatpush1.bf16.msra.mxu0 %v713
    %909 = vmatprep.subr.bf16.mxu0 %v711
    %910 = vmatpush1.bf16.msra.mxu0 %v710
    %911 = vmatprep.subr.bf16.mxu0 %v756
    %912 = vmatpush2.bf16.msra.mxu0 %v755
    %913 = vmatprep.subr.bf16.mxu0 %v753
    %914 = vmatpush2.bf16.msra.mxu0 %v752
    %915 = vmatprep.subr.bf16.mxu0 %v750
    %916 = vmatpush2.bf16.msra.mxu0 %v749
    %917 = vmatprep.subr.bf16.mxu0 %v747
    %918 = vmatpush2.bf16.msra.mxu0 %v746
    %919 = vmatprep.subr.bf16.mxu0 %v744
    %920 = vmatpush2.bf16.msra.mxu0 %v743
    %921 = vmatprep.subr.bf16.mxu0 %v741
    %922 = vmatpush2.bf16.msra.mxu0 %v740
    %923 = vmatprep.subr.bf16.mxu0 %v738
    %924 = vmatpush2.bf16.msra.mxu0 %v737
    %925 = vmatprep.subr.bf16.mxu0 %v735
    %926 = vmatpush2.bf16.msra.mxu0 %v734
    %927 = vmatprep.mubr.bf16.mxu0 %v213
    %928 = vmatmul.mubr.bf16.gmra.mxu0 %v212
    %v929 = vpop.f32.mrf.mxu0
    %v930 = vadd.f32 %v889, %v929
    %v931 = vpop.f32.mrf.mxu0
    %v932 = vadd.f32 %v891, %v931
    %v933 = vpop.f32.mrf.mxu0
    %v934 = vpop.f32.mrf.mxu0
    %935 = vdwg.mxu0
    %936 = vmatprep.subr.bf16.mxu0 0
    %937 = vmatpush1.bf16.msra.mxu0 %v685
    %938 = vmatprep.subr.bf16.mxu0 0
    %939 = vmatpush1.bf16.msra.mxu0 %v682
    %940 = vmatprep.subr.bf16.mxu0 0
    %941 = vmatpush1.bf16.msra.mxu0 %v679
    %942 = vmatprep.subr.bf16.mxu0 0
    %943 = vmatpush1.bf16.msra.mxu0 %v676
    %944 = vmatprep.subr.bf16.mxu0 0
    %945 = vmatpush1.bf16.msra.mxu0 %v673
    %946 = vmatprep.subr.bf16.mxu0 0
    %947 = vmatpush1.bf16.msra.mxu0 %v670
    %948 = vmatprep.subr.bf16.mxu0 0
    %949 = vmatpush1.bf16.msra.mxu0 %v667
    %950 = vmatprep.subr.bf16.mxu0 0
    %951 = vmatpush1.bf16.msra.mxu0 %v664
    %952 = vmatprep.subr.bf16.mxu0 0
    %953 = vmatpush2.bf16.msra.mxu0 %v709
    %954 = vmatprep.subr.bf16.mxu0 0
    %955 = vmatpush2.bf16.msra.mxu0 %v706
    %956 = vmatprep.subr.bf16.mxu0 0
    %957 = vmatpush2.bf16.msra.mxu0 %v703
    %958 = vmatprep.subr.bf16.mxu0 0
    %959 = vmatpush2.bf16.msra.mxu0 %v700
    %960 = vmatprep.subr.bf16.mxu0 0
    %961 = vmatpush2.bf16.msra.mxu0 %v697
    %962 = vmatprep.subr.bf16.mxu0 0
    %963 = vmatpush2.bf16.msra.mxu0 %v694
    %964 = vmatprep.subr.bf16.mxu0 0
    %965 = vmatpush2.bf16.msra.mxu0 %v691
    %966 = vmatprep.subr.bf16.mxu0 0
    %967 = vmatpush2.bf16.msra.mxu0 %v688
    %968 = vmatprep.mubr.bf16.mxu0 %v211
    %969 = vmatmul.mubr.bf16.gmra.mxu0 %v210
    %v970 = vpop.f32.mrf.mxu0
    %v971 = vadd.f32 0.0, %v970
    %v972 = vpop.f32.mrf.mxu0
    %v973 = vpop.f32.mrf.mxu0
    %v974 = vpop.f32.mrf.mxu0
    %975 = vdwg.mxu0
    %976 = vmatprep.subr.bf16.mxu0 0
    %977 = vmatpush1.bf16.msra.mxu0 %v733
    %978 = vmatprep.subr.bf16.mxu0 0
    %979 = vmatpush1.bf16.msra.mxu0 %v730
    %980 = vmatprep.subr.bf16.mxu0 0
    %981 = vmatpush1.bf16.msra.mxu0 %v727
    %982 = vmatprep.subr.bf16.mxu0 0
    %983 = vmatpush1.bf16.msra.mxu0 %v724
    %984 = vmatprep.subr.bf16.mxu0 0
    %985 = vmatpush1.bf16.msra.mxu0 %v721
    %986 = vmatprep.subr.bf16.mxu0 0
    %987 = vmatpush1.bf16.msra.mxu0 %v718
    %988 = vmatprep.subr.bf16.mxu0 0
    %989 = vmatpush1.bf16.msra.mxu0 %v715
    %990 = vmatprep.subr.bf16.mxu0 0
    %991 = vmatpush1.bf16.msra.mxu0 %v712
    %992 = vmatprep.subr.bf16.mxu0 0
    %993 = vmatpush2.bf16.msra.mxu0 %v757
    %994 = vmatprep.subr.bf16.mxu0 0
    %995 = vmatpush2.bf16.msra.mxu0 %v754
    %996 = vmatprep.subr.bf16.mxu0 0
    %997 = vmatpush2.bf16.msra.mxu0 %v751
    %998 = vmatprep.subr.bf16.mxu0 0
    %999 = vmatpush2.bf16.msra.mxu0 %v748
    %1000 = vmatprep.subr.bf16.mxu0 0
    %1001 = vmatpush2.bf16.msra.mxu0 %v745
    %1002 = vmatprep.subr.bf16.mxu0 0
    %1003 = vmatpush2.bf16.msra.mxu0 %v742
    %1004 = vmatprep.subr.bf16.mxu0 0
    %1005 = vmatpush2.bf16.msra.mxu0 %v739
    %1006 = vmatprep.subr.bf16.mxu0 0
    %1007 = vmatpush2.bf16.msra.mxu0 %v736
    %1008 = vmatprep.mubr.bf16.mxu0 %v213
    %1009 = vmatmul.mubr.bf16.gmra.mxu0 %v212
    %v1010 = vpop.f32.mrf.mxu0
    %v1011 = vadd.f32 %v971, %v1010
    %v1012 = vpop.f32.mrf.mxu0
    %v1013 = vpop.f32.mrf.mxu0
    %v1014 = vpop.f32.mrf.mxu0
    %1015 = vdwg.mxu0
    %v1016 = vmax.f32 %v930, 0.0
    %v1017 = vmax.f32 %v932, 0.0
    %v1018 = vmax.f32 %v1011, 0.0
    %v1019 = vpack.c.bf16 %v1016, %v1016
    %v1020 = vpack.c.bf16 %v1017, %v1017
    %v1021 = vpack.c.bf16 %v1018, %v1018
    %v1022 = vld [vmem:[#allocation8] sm:$0xf]
    %v1023 = vld [vmem:[#allocation8 + $0x4] sm:$0xf]
    %v1024 = vld [vmem:[#allocation8 + $0x8] sm:$0xf]
    %v1025 = vld [vmem:[#allocation8 + $0xc] sm:$0xf]
    %v1026 = vld [vmem:[#allocation8 + $0x10] sm:$0xf]
    %v1027 = vld [vmem:[#allocation8 + $0x14] sm:$0xf]
    %v1028 = vld [vmem:[#allocation8 + $0x18] sm:$0xf]
    %v1029 = vld [vmem:[#allocation8 + $0x1c] sm:$0xf]
    %v1030 = vld [vmem:[#allocation8 + $0x20] sm:$0xf]
    %v1031 = vld [vmem:[#allocation8 + $0x24] sm:$0xf]
    %v1032 = vld [vmem:[#allocation8 + $0x28] sm:$0xf]
    %v1033 = vld [vmem:[#allocation8 + $0x2c] sm:$0xf]
    %v1034 = vld [vmem:[#allocation8 + $0x30] sm:$0xf]
    %v1035 = vld [vmem:[#allocation8 + $0x34] sm:$0xf]
    %v1036 = vld [vmem:[#allocation8 + $0x38] sm:$0xf]
    %v1037 = vld [vmem:[#allocation8 + $0x3c] sm:$0xf]
    %v1038 = vld [vmem:[#allocation8 + $0x40] sm:$0xf]
    %v1039 = vld [vmem:[#allocation8 + $0x44] sm:$0xf]
    %v1040 = vld [vmem:[#allocation8 + $0x48] sm:$0xf]
    %v1041 = vld [vmem:[#allocation8 + $0x4c] sm:$0xf]
    %v1042 = vld [vmem:[#allocation8 + $0x50] sm:$0xf]
    %v1043 = vld [vmem:[#allocation8 + $0x54] sm:$0xf]
    %v1044 = vld [vmem:[#allocation8 + $0x58] sm:$0xf]
    %v1045 = vld [vmem:[#allocation8 + $0x5c] sm:$0xf]
    %v1046 = vld [vmem:[#allocation8 + $0x60] sm:$0xf]
    %v1047 = vld [vmem:[#allocation8 + $0x64] sm:$0xf]
    %v1048 = vld [vmem:[#allocation8 + $0x68] sm:$0xf]
    %v1049 = vld [vmem:[#allocation8 + $0x6c] sm:$0xf]
    %v1050 = vld [vmem:[#allocation8 + $0x70] sm:$0xf]
    %v1051 = vld [vmem:[#allocation8 + $0x74] sm:$0xf]
    %v1052 = vld [vmem:[#allocation8 + $0x78] sm:$0xf]
    %v1053 = vld [vmem:[#allocation8 + $0x7c] sm:$0xf]
    %v1054 = vld [vmem:[#allocation8 + $0x80] sm:$0xf]
    %v1055 = vld [vmem:[#allocation8 + $0x84] sm:$0xf]
    %v1056 = vld [vmem:[#allocation8 + $0x88] sm:$0xf]
    %v1057 = vld [vmem:[#allocation8 + $0x8c] sm:$0xf]
    %v1058 = vld [vmem:[#allocation8 + $0x90] sm:$0xf]
    %v1059 = vld [vmem:[#allocation8 + $0x94] sm:$0xf]
    %v1060 = vld [vmem:[#allocation8 + $0x98] sm:$0xf]
    %v1061 = vld [vmem:[#allocation8 + $0x9c] sm:$0xf]
    %v1062 = vld [vmem:[#allocation8 + $0xa0] sm:$0xf]
    %v1063 = vld [vmem:[#allocation8 + $0xa4] sm:$0xf]
    %v1064 = vld [vmem:[#allocation8 + $0xa8] sm:$0xf]
    %v1065 = vld [vmem:[#allocation8 + $0xac] sm:$0xf]
    %v1066 = vld [vmem:[#allocation8 + $0xb0] sm:$0xf]
    %v1067 = vld [vmem:[#allocation8 + $0xb4] sm:$0xf]
    %v1068 = vld [vmem:[#allocation8 + $0xb8] sm:$0xf]
    %v1069 = vld [vmem:[#allocation8 + $0xbc] sm:$0xf]
    %v1118 = vunpack.c.l.b16 %v1022
    %v1119 = vunpack.c.l.b16 %v1023
    %v1120 = vunpack.c.l.b16 %v1024
    %v1121 = vunpack.c.l.b16 %v1025
    %v1122 = vunpack.c.l.b16 %v1026
    %v1123 = vunpack.c.l.b16 %v1027
    %v1124 = vunpack.c.l.b16 %v1028
    %v1125 = vunpack.c.l.b16 %v1029
    %v1126 = vunpack.c.l.b16 %v1030
    %v1127 = vunpack.c.l.b16 %v1031
    %v1128 = vunpack.c.l.b16 %v1032
    %v1129 = vunpack.c.l.b16 %v1033
    %v1130 = vunpack.c.l.b16 %v1034
    %v1131 = vunpack.c.l.b16 %v1035
    %v1132 = vunpack.c.l.b16 %v1036
    %v1133 = vunpack.c.l.b16 %v1037
    %v1134 = vunpack.c.l.b16 %v1038
    %v1135 = vunpack.c.l.b16 %v1039
    %v1136 = vunpack.c.l.b16 %v1040
    %v1137 = vunpack.c.l.b16 %v1041
    %v1138 = vunpack.c.l.b16 %v1042
    %v1139 = vunpack.c.l.b16 %v1043
    %v1140 = vunpack.c.l.b16 %v1044
    %v1141 = vunpack.c.l.b16 %v1045
    %v1142 = vunpack.c.l.b16 %v1046
    %v1143 = vunpack.c.l.b16 %v1047
    %v1144 = vunpack.c.l.b16 %v1048
    %v1145 = vunpack.c.l.b16 %v1049
    %v1146 = vunpack.c.l.b16 %v1050
    %v1147 = vunpack.c.l.b16 %v1051
    %v1148 = vunpack.c.l.b16 %v1052
    %v1149 = vunpack.c.l.b16 %v1053
    %v1150 = vunpack.c.l.b16 %v1054
    %v1151 = vunpack.c.l.b16 %v1055
    %v1152 = vunpack.c.l.b16 %v1056
    %v1153 = vunpack.c.l.b16 %v1057
    %v1154 = vunpack.c.l.b16 %v1058
    %v1155 = vunpack.c.l.b16 %v1059
    %v1156 = vunpack.c.l.b16 %v1060
    %v1157 = vunpack.c.l.b16 %v1061
    %v1158 = vunpack.c.l.b16 %v1062
    %v1159 = vunpack.c.l.b16 %v1063
    %v1160 = vunpack.c.l.b16 %v1064
    %v1161 = vunpack.c.l.b16 %v1065
    %v1162 = vunpack.c.l.b16 %v1066
    %v1163 = vunpack.c.l.b16 %v1067
    %v1164 = vunpack.c.l.b16 %v1068
    %v1165 = vunpack.c.l.b16 %v1069
    %v1166 = vpack.c.b16 %v1119, %v1118
    %v1167 = vpack.c.b16 %v1121, %v1120
    %v1168 = vpack.c.b16 %v1123, %v1122
    %v1169 = vpack.c.b16 %v1125, %v1124
    %v1170 = vpack.c.b16 %v1127, %v1126
    %v1171 = vpack.c.b16 %v1129, %v1128
    %v1172 = vpack.c.b16 %v1131, %v1130
    %v1173 = vpack.c.b16 %v1133, %v1132
    %v1174 = vpack.c.b16 %v1135, %v1134
    %v1175 = vpack.c.b16 %v1137, %v1136
    %v1176 = vpack.c.b16 %v1139, %v1138
    %v1177 = vpack.c.b16 %v1141, %v1140
    %v1178 = vpack.c.b16 %v1143, %v1142
    %v1179 = vpack.c.b16 %v1145, %v1144
    %v1180 = vpack.c.b16 %v1147, %v1146
    %v1181 = vpack.c.b16 %v1149, %v1148
    %v1182 = vpack.c.b16 %v1151, %v1150
    %v1183 = vpack.c.b16 %v1153, %v1152
    %v1184 = vpack.c.b16 %v1155, %v1154
    %v1185 = vpack.c.b16 %v1157, %v1156
    %v1186 = vpack.c.b16 %v1159, %v1158
    %v1187 = vpack.c.b16 %v1161, %v1160
    %v1188 = vpack.c.b16 %v1163, %v1162
    %v1189 = vpack.c.b16 %v1165, %v1164
    %1214 = vmatprep.subr.bf16.mxu0 0
    %1215 = vmatpush1.bf16.msra.mxu0 %v1173
    %1216 = vmatprep.subr.bf16.mxu0 0
    %1217 = vmatpush1.bf16.msra.mxu0 %v1172
    %1218 = vmatprep.subr.bf16.mxu0 0
    %1219 = vmatpush1.bf16.msra.mxu0 %v1171
    %1220 = vmatprep.subr.bf16.mxu0 0
    %1221 = vmatpush1.bf16.msra.mxu0 %v1170
    %1222 = vmatprep.subr.bf16.mxu0 0
    %1223 = vmatpush1.bf16.msra.mxu0 %v1169
    %1224 = vmatprep.subr.bf16.mxu0 0
    %1225 = vmatpush1.bf16.msra.mxu0 %v1168
    %1226 = vmatprep.subr.bf16.mxu0 0
    %1227 = vmatpush1.bf16.msra.mxu0 %v1167
    %1228 = vmatprep.subr.bf16.mxu0 0
    %1229 = vmatpush1.bf16.msra.mxu0 %v1166
    %1230 = vmatprep.subr.bf16.mxu0 0
    %1231 = vmatpush2.bf16.msra.mxu0 %v1181
    %1232 = vmatprep.subr.bf16.mxu0 0
    %1233 = vmatpush2.bf16.msra.mxu0 %v1180
    %1234 = vmatprep.subr.bf16.mxu0 0
    %1235 = vmatpush2.bf16.msra.mxu0 %v1179
    %1236 = vmatprep.subr.bf16.mxu0 0
    %1237 = vmatpush2.bf16.msra.mxu0 %v1178
    %1238 = vmatprep.subr.bf16.mxu0 0
    %1239 = vmatpush2.bf16.msra.mxu0 %v1177
    %1240 = vmatprep.subr.bf16.mxu0 0
    %1241 = vmatpush2.bf16.msra.mxu0 %v1176
    %1242 = vmatprep.subr.bf16.mxu0 0
    %1243 = vmatpush2.bf16.msra.mxu0 %v1175
    %1244 = vmatprep.subr.bf16.mxu0 0
    %1245 = vmatpush2.bf16.msra.mxu0 %v1174
    %1246 = vmatprep.mubr.bf16.mxu0 %v1020
    %1247 = vmatmul.mubr.bf16.gmra.mxu0 %v1019
    %v1248 = vpop.f32.mrf.mxu0
    %v1249 = vadd.f32 0.0, %v1248
    %v1250 = vpop.f32.mrf.mxu0
    %v1251 = vpop.f32.mrf.mxu0
    %v1252 = vpop.f32.mrf.mxu0
    %1253 = vdwg.mxu0
    %1254 = vmatprep.subr.bf16.mxu0 0
    %1255 = vmatpush1.bf16.msra.mxu0 %v1189
    %1256 = vmatprep.subr.bf16.mxu0 0
    %1257 = vmatpush1.bf16.msra.mxu0 %v1188
    %1258 = vmatprep.subr.bf16.mxu0 0
    %1259 = vmatpush1.bf16.msra.mxu0 %v1187
    %1260 = vmatprep.subr.bf16.mxu0 0
    %1261 = vmatpush1.bf16.msra.mxu0 %v1186
    %1262 = vmatprep.subr.bf16.mxu0 0
    %1263 = vmatpush1.bf16.msra.mxu0 %v1185
    %1264 = vmatprep.subr.bf16.mxu0 0
    %1265 = vmatpush1.bf16.msra.mxu0 %v1184
    %1266 = vmatprep.subr.bf16.mxu0 0
    %1267 = vmatpush1.bf16.msra.mxu0 %v1183
    %1268 = vmatprep.subr.bf16.mxu0 0
    %1269 = vmatpush1.bf16.msra.mxu0 %v1182
    %1270 = vmatprep.subr.bf16.mxu0 0
    %1271 = vmatpush2.bf16.msra.mxu0 0
    %1272 = vmatprep.subr.bf16.mxu0 0
    %1273 = vmatpush2.bf16.msra.mxu0 0
    %1274 = vmatprep.subr.bf16.mxu0 0
    %1275 = vmatpush2.bf16.msra.mxu0 0
    %1276 = vmatprep.subr.bf16.mxu0 0
    %1277 = vmatpush2.bf16.msra.mxu0 0
    %1278 = vmatprep.subr.bf16.mxu0 0
    %1279 = vmatpush2.bf16.msra.mxu0 0
    %1280 = vmatprep.subr.bf16.mxu0 0
    %1281 = vmatpush2.bf16.msra.mxu0 0
    %1282 = vmatprep.subr.bf16.mxu0 0
    %1283 = vmatpush2.bf16.msra.mxu0 0
    %1284 = vmatprep.subr.bf16.mxu0 0
    %1285 = vmatpush2.bf16.msra.mxu0 0
    %1286 = vmatprep.mubr.bf16.mxu0 0
    %1287 = vmatmul.mubr.bf16.gmra.mxu0 %v1021
    %v1288 = vpop.f32.mrf.mxu0
    %v1289 = vadd.f32 %v1249, %v1288
    %v1290 = vpop.f32.mrf.mxu0
    %v1291 = vpop.f32.mrf.mxu0
    %v1292 = vpop.f32.mrf.mxu0
    %1293 = vdwg.mxu0
    %v1294 = vtanh.pop %v1289
    %v1295 = vmul.f32 %v1294, 4.0
    %v1296 = vadd.f32 %v1295, 0.0
    %1297 = vst [vmem:[#allocation10] sm:$0x3] %v1296
    // Predicated region
    $region34: #{tpu_custom_call.1} parent=1 // pred_check
      _
    $region35: #{tpu_custom_call.1} parent=1 // pred_check_branch
      %1299 = sbr.rel (0) target = $region37
    $region36: #{tpu_custom_call.1} parent=1 // pred_region
      %s1301 = ssub.s32 32, 32
      %1302 = vsyncadd [#allocation4], %s1301
      %s1304 = sshll.u32 [#allocation10], 4
      %s1305 = int_to_ptr.vmem [resolvable:$true] %s1304
      %1307 = dma.vmem_to_hbm [thread:$0]  %s1305, 32, %s4, [#allocation4]
    $region37: #{tpu_custom_call.1} parent=1 // pred_fallthru
      _
    // Predicated region
    $region38: #{tpu_custom_call.1} parent=1 // pred_check
      _
    $region39: #{tpu_custom_call.1} parent=1 // pred_check_branch
      %1309 = sbr.rel (0) target = $region41
    $region40: #{tpu_custom_call.1} parent=1 // pred_region
      %1310 = dma.done [#allocation4], 32
    $region41: #{tpu_custom_call.1} parent=1 // pred_fallthru
      _
    %1311 = vsyncpa [#allocation3], 1
    %1312 = vsyncpa [#allocation6], 1
    %1313 = vsyncpa [#allocation9], 1
    %1314 = vsyncpa [#allocation4], 1

</llo_original>
